<compile_context>
chip_gen: v6e
topology: v6e:2x2x1
jax: 0.10.0
libtpu: 0.0.40
codegen_flags: <defaults>
</compile_context>

<pallas_src>
from collections import defaultdict

import jax
import jax.numpy as jnp
from jax.experimental import pallas as pl
from jax.experimental.pallas import tpu as pltpu

LANE = 128


def _round_up(x: int, m: int) -> int:
    return (x + m - 1) // m * m


def _vmem_capacity_bytes() -> int:
    try:
        return int(pltpu.get_tpu_info().vmem_capacity_bytes)
    except Exception:
        return 64 << 20  # conservative (v7x-sized) fallback — safe on every part


# ---------------------------------------------------------------------------
# Pallas kernel: one M-tile of rows, all heads fused along the padded out axis
#   y = x_rgb @ W_rgb + x_veg @ W_veg + x_geo @ W_geo + b
# bf16 operands, f32 MXU accumulation, f32 bias / output.
# ---------------------------------------------------------------------------
def _fused_heads_kernel(xr_ref, xv_ref, xg_ref, wr_ref, wv_ref, wg_ref, b_ref, o_ref):
    acc = jnp.dot(xr_ref[...], wr_ref[...], preferred_element_type=jnp.float32)
    acc = acc + jnp.dot(xv_ref[...], wv_ref[...], preferred_element_type=jnp.float32)
    acc = acc + jnp.dot(xg_ref[...], wg_ref[...], preferred_element_type=jnp.float32)
    o_ref[...] = (acc + b_ref[...]).astype(o_ref.dtype)


def fused_multihead_linear(xr, xv, xg, wr, wv, wg, b, *, tile_m=None,
                           act_buffers=None, min_grid_steps=4):
    """xr/xv/xg: (M, E) bf16 activations; wr/wv/wg: (E, Npad) bf16 fused weights;
    b: (1, Npad) f32.  Returns (M, Npad) f32."""
    M, E = xr.shape
    Npad = wr.shape[1]
    act_bytes = jnp.dtype(xr.dtype).itemsize
    w_bytes = jnp.dtype(wr.dtype).itemsize

    # Generation-aware VMEM budgeting: v7x (64 MiB) -> ~48 MiB limit / ~40 MiB
    # tiling budget; v5e/v6e (128 MiB) -> ~100 / ~92 MiB.
    vmem_cap = _vmem_capacity_bytes()
    vmem_cap_limit = min(int(vmem_cap * 0.78), vmem_cap - (16 << 20))
    vmem_budget = vmem_cap_limit - (8 << 20)

    if tile_m is None:
        tile_m = 2048 if vmem_cap >= (96 << 20) else 1024

    # bf16 sublane packing -> row tiles are multiples of 16 (8 for f32).
    sub = 16 if act_bytes == 2 else 8
    tm = min(tile_m, _round_up(M, sub))
    tm = max(sub, (tm // sub) * sub)

    # Weights/bias are VMEM-resident (single-buffered); acts/output pipeline.
    resident = 3 * E * Npad * w_bytes + Npad * jnp.dtype(b.dtype).itemsize
    n_act_buf = act_buffers if act_buffers else 2

    def vmem_estimate(tm_):
        x_b = 3 * tm_ * E * act_bytes * n_act_buf
        o_b = tm_ * Npad * 4 * 2
        return x_b + o_b + resident

    while tm > sub and vmem_estimate(tm) > vmem_budget:
        tm = max(sub, (tm // 2 // sub) * sub)

    # Keep >= min_grid_steps grid steps when M allows it (keeps both v7x
    # TensorCores busy under "parallel" semantics and the pipeline deep).
    while pl.cdiv(M, tm) < min_grid_steps and tm > sub:
        tm = max(sub, ((tm // 2 + sub - 1) // sub) * sub)

    grid = (pl.cdiv(M, tm),)
    vmem_limit = int(min(max(vmem_estimate(tm) + (8 << 20), 32 << 20), vmem_cap_limit))

    def run(single_buffer_weights: bool):
        w_mode = pl.Buffered(1) if single_buffer_weights else None
        a_mode = pl.Buffered(act_buffers) if act_buffers else None

        def spec(shape, imap, mode):
            if mode is None:
                return pl.BlockSpec(shape, imap)
            return pl.BlockSpec(shape, imap, pipeline_mode=mode)

        return pl.pallas_call(
            _fused_heads_kernel,
            out_shape=jax.ShapeDtypeStruct((M, Npad), jnp.float32),
            grid_spec=pltpu.PrefetchScalarGridSpec(
                num_scalar_prefetch=0,
                grid=grid,
                in_specs=[
                    spec((tm, E), lambda i: (i, 0), a_mode),     # x_rgb tile
                    spec((tm, E), lambda i: (i, 0), a_mode),     # x_veg tile
                    spec((tm, E), lambda i: (i, 0), a_mode),     # x_geo tile
                    spec((E, Npad), lambda i: (0, 0), w_mode),   # W_rgb (resident)
                    spec((E, Npad), lambda i: (0, 0), w_mode),   # W_veg (resident)
                    spec((E, Npad), lambda i: (0, 0), w_mode),   # W_geo (resident)
                    spec((1, Npad), lambda i: (0, 0), w_mode),   # bias  (resident)
                ],
                out_specs=pl.BlockSpec((tm, Npad), lambda i: (i, 0)),
            ),
            compiler_params=pltpu.CompilerParams(
                dimension_semantics=("parallel",),
                vmem_limit_bytes=vmem_limit,
            ),
        )(xr, xv, xg, wr, wv, wg, b)

    try:
        return run(True)
    except Exception:
        # Fallback if pipeline_mode=pl.Buffered(1) is unsupported in this jax.
        return run(False)


# ---------------------------------------------------------------------------
# AggregationLP module (use_attention=False path)
# ---------------------------------------------------------------------------
class AggregationLP:
    def __init__(self, embed_dim: int, head_dims: dict, use_attention: bool = False,
                 std: float = 0.02, key=None):
        assert not use_attention, "attention path not implemented"
        self.embed_dim = embed_dim
        self.concat_dim = embed_dim * 3
        self.head_dims = dict(head_dims)
        if key is None:
            key = jax.random.PRNGKey(0)

        # Per-head parameters with PyTorch semantics: w (3E, out), b (out,)
        # (y = x @ w + b  ==  nn.Linear with its weight pre-transposed).
        self.params = {}
        for hname, out_dim in self.head_dims.items():
            key, k_cls, k_patch = jax.random.split(key, 3)
            w_cls = (jax.random.truncated_normal(
                k_cls, -2.0, 2.0, (self.concat_dim, out_dim), jnp.float32) * std)
            w_patch = (jax.random.truncated_normal(
                k_patch, -2.0, 2.0, (self.concat_dim, out_dim), jnp.float32) * std)
            self.params[hname] = {
                "cls": {"w": w_cls, "b": jnp.zeros((out_dim,), jnp.float32)},
                "patch": {"w": w_patch, "b": jnp.zeros((out_dim,), jnp.float32)},
            }

        # ---- Build fused (all-heads) weights once -------------------------
        E = embed_dim
        self.head_slices = {}
        start = 0
        for hname, od in self.head_dims.items():
            self.head_slices[hname] = (start, od)
            start += od
        total_out = start
        self.total_out = total_out
        # Kept at a multiple of 128: this op is HBM-bound, so rounding to 256
        # (full v6e/v7x MXU width) would only add output/weight bytes.
        self.padded_out = _round_up(max(total_out, LANE), LANE)
        pad_cols = self.padded_out - total_out

        def fuse(which, rows):
            return jnp.concatenate(
                [self.params[h][which]["w"][rows] for h in self.head_dims], axis=1)

        def pad_n(w):
            return jnp.pad(w, ((0, 0), (0, pad_cols))) if pad_cols else w

        # Patch-head weights: K split into RGB/VEG/GEO slices, heads fused on N,
        # N zero-padded to a lane-dense multiple of 128, stored in bf16 (the
        # kernel accumulates in f32).
        self.w_patch_rgb = pad_n(fuse("patch", slice(0, E))).astype(jnp.bfloat16)
        self.w_patch_veg = pad_n(fuse("patch", slice(E, 2 * E))).astype(jnp.bfloat16)
        self.w_patch_geo = pad_n(fuse("patch", slice(2 * E, 3 * E))).astype(jnp.bfloat16)
        b_patch = jnp.concatenate(
            [self.params[h]["patch"]["b"] for h in self.head_dims], axis=0)
        self.b_patch = pad_n(b_patch.reshape(1, total_out)).astype(jnp.float32)

        # Cls-head weights: fused across heads, K split, f32 (tiny, plain JAX).
        self.w_cls_rgb = fuse("cls", slice(0, E))
        self.w_cls_veg = fuse("cls", slice(E, 2 * E))
        self.w_cls_geo = fuse("cls", slice(2 * E, 3 * E))
        self.b_cls = jnp.concatenate(
            [self.params[h]["cls"]["b"] for h in self.head_dims], axis=0).reshape(1, total_out)

    def __call__(self, x_cls_rgb, x_cls_veg, x_cls_geo,
                 x_patch_rgb, x_patch_veg, x_patch_geo):
        B, Npatch, E = x_patch_rgb.shape
        M = B * Npatch
        xr = x_patch_rgb.reshape(M, E).astype(jnp.bfloat16)
        xv = x_patch_veg.reshape(M, E).astype(jnp.bfloat16)
        xg = x_patch_geo.reshape(M, E).astype(jnp.bfloat16)

        # Hot path: one fused, M-tiled, lane-dense Pallas matmul for all heads.
        patch_all = fused_multihead_linear(
            xr, xv, xg, self.w_patch_rgb, self.w_patch_veg, self.w_patch_geo,
            self.b_patch)

        # Cls path: a few rows — plain JAX (a Pallas launch would be overhead).
        cls_all = (x_cls_rgb @ self.w_cls_rgb
                   + x_cls_veg @ self.w_cls_veg
                   + x_cls_geo @ self.w_cls_geo
                   + self.b_cls)

        # NOTE: with many tiny heads these narrow column slices become strided
        # HBM copies; consumers able to read the fused (M, Npad) slab should
        # slice lazily instead.  Kept per-head here to match the PyTorch module.
        out = defaultdict(dict)
        for hname, (start, od) in self.head_slices.items():
            out[hname]["cls"] = cls_all[:, start:start + od]
            out[hname]["patch"] = patch_all[:, start:start + od].reshape(B, Npatch, od)
        return out


# ---------------------------------------------------------------------------
# Pure-JAX f32 reference (original per-head weights + concat, as in PyTorch)
# ---------------------------------------------------------------------------
def reference_forward(model, x_cls_rgb, x_cls_veg, x_cls_geo,
                      x_patch_rgb, x_patch_veg, x_patch_geo):
    x_cls = jnp.concatenate([x_cls_rgb, x_cls_veg, x_cls_geo], axis=-1)
    x_patch = jnp.concatenate([x_patch_rgb, x_patch_veg, x_patch_geo], axis=-1)
    out = defaultdict(dict)
    for hname, p in model.params.items():
        out[hname]["cls"] = x_cls @ p["cls"]["w"] + p["cls"]["b"]
        out[hname]["patch"] = x_patch @ p["patch"]["w"] + p["patch"]["b"]
    return out


if __name__ == "__main__":
    key = jax.random.PRNGKey(0)

    B = 2            # batch
    N = 8            # patch tokens
    E = 32           # per-modality embed dim  -> concat_dim = 96
    head_dims = {"head_a": 16, "head_b": 8}

    key, *ks = jax.random.split(key, 7)
    x_cls_rgb = jax.random.normal(ks[0], (B, E), jnp.float32)
    x_cls_veg = jax.random.normal(ks[1], (B, E), jnp.float32)
    x_cls_geo = jax.random.normal(ks[2], (B, E), jnp.float32)
    x_patch_rgb = jax.random.normal(ks[3], (B, N, E), jnp.float32)
    x_patch_veg = jax.random.normal(ks[4], (B, N, E), jnp.float32)
    x_patch_geo = jax.random.normal(ks[5], (B, N, E), jnp.float32)

    key, mkey = jax.random.split(key)
    model = AggregationLP(embed_dim=E, head_dims=head_dims, use_attention=False, key=mkey)

    out = model(x_cls_rgb, x_cls_veg, x_cls_geo,
                x_patch_rgb, x_patch_veg, x_patch_geo)
    for hname in out:
        out[hname]["cls"] = jax.block_until_ready(out[hname]["cls"])
        out[hname]["patch"] = jax.block_until_ready(out[hname]["patch"])

    ref = reference_forward(model, x_cls_rgb, x_cls_veg, x_cls_geo,
                            x_patch_rgb, x_patch_veg, x_patch_geo)

    # Patch path streams bf16 activations/weights with f32 accumulation, so the
    # tolerance vs the f32 reference is loosened accordingly.
    ok = True
    for hname in head_dims:
        ok &= bool(jnp.allclose(out[hname]["cls"], ref[hname]["cls"],
                                atol=1e-5, rtol=1e-5))
        ok &= bool(jnp.allclose(out[hname]["patch"], ref[hname]["patch"],
                                atol=2e-2, rtol=2e-2))
        assert out[hname]["cls"].shape == (B, head_dims[hname])
        assert out[hname]["patch"].shape == (B, N, head_dims[hname])

    if ok:
        print("KERNEL_OK")
    else:
        raise SystemExit("mismatch vs reference")
</pallas_src>

<mosaic_0001>
module attributes {stable_mosaic.version = 11 : i64} {
  func.func @_fused_heads_kernel(%arg0: i32, %arg1: memref<16x32xbf16, #tpu.memory_space<vmem>>, %arg2: memref<16x32xbf16, #tpu.memory_space<vmem>>, %arg3: memref<16x32xbf16, #tpu.memory_space<vmem>>, %arg4: memref<32x128xbf16, #tpu.memory_space<vmem>>, %arg5: memref<32x128xbf16, #tpu.memory_space<vmem>>, %arg6: memref<32x128xbf16, #tpu.memory_space<vmem>>, %arg7: memref<1x128xf32, #tpu.memory_space<vmem>>, %arg8: memref<16x128xf32, #tpu.memory_space<vmem>>) attributes {dimension_semantics = [#tpu.dimension_semantics<parallel>], iteration_bounds = array<i64: 1>, scalar_prefetch = 0 : i64, scratch_operands = 0 : i64, tpu.core_type = #tpu.core_type<tc>, window_params = [{transform_indices = @transform_0, window_bounds = array<i64: 16, 32>}, {transform_indices = @transform_1, window_bounds = array<i64: 16, 32>}, {transform_indices = @transform_2, window_bounds = array<i64: 16, 32>}, {pipeline_mode = #tpu.pipeline_mode<synchronous>, transform_indices = @transform_3, window_bounds = array<i64: 32, 128>}, {pipeline_mode = #tpu.pipeline_mode<synchronous>, transform_indices = @transform_4, window_bounds = array<i64: 32, 128>}, {pipeline_mode = #tpu.pipeline_mode<synchronous>, transform_indices = @transform_5, window_bounds = array<i64: 32, 128>}, {pipeline_mode = #tpu.pipeline_mode<synchronous>, transform_indices = @transform_6, window_bounds = array<i64: 1, 128>}, {transform_indices = @transform_7, window_bounds = array<i64: 16, 128>}]} {
    %c0 = arith.constant 0 : index
    %c0_0 = arith.constant 0 : index
    %0 = vector.load %arg1[%c0, %c0_0] : memref<16x32xbf16, #tpu.memory_space<vmem>>, vector<16x32xbf16>
    %c0_1 = arith.constant 0 : index
    %c0_2 = arith.constant 0 : index
    %1 = vector.load %arg4[%c0_1, %c0_2] : memref<32x128xbf16, #tpu.memory_space<vmem>>, vector<32x128xbf16>
    %cst = arith.constant dense<0.000000e+00> : vector<16x128xf32>
    %2 = tpu.matmul %0, %1, %cst {dimension_numbers = #tpu.dot_dimension_numbers<[1], [0], [0], [1], [0, 0, 1, 1], [], []>} : vector<16x32xbf16>, vector<32x128xbf16>, vector<16x128xf32> -> vector<16x128xf32>
    %c0_3 = arith.constant 0 : index
    %c0_4 = arith.constant 0 : index
    %3 = vector.load %arg2[%c0_3, %c0_4] : memref<16x32xbf16, #tpu.memory_space<vmem>>, vector<16x32xbf16>
    %c0_5 = arith.constant 0 : index
    %c0_6 = arith.constant 0 : index
    %4 = vector.load %arg5[%c0_5, %c0_6] : memref<32x128xbf16, #tpu.memory_space<vmem>>, vector<32x128xbf16>
    %cst_7 = arith.constant dense<0.000000e+00> : vector<16x128xf32>
    %5 = tpu.matmul %3, %4, %cst_7 {dimension_numbers = #tpu.dot_dimension_numbers<[1], [0], [0], [1], [0, 0, 1, 1], [], []>} : vector<16x32xbf16>, vector<32x128xbf16>, vector<16x128xf32> -> vector<16x128xf32>
    %6 = arith.addf %2, %5 : vector<16x128xf32>
    %c0_8 = arith.constant 0 : index
    %c0_9 = arith.constant 0 : index
    %7 = vector.load %arg3[%c0_8, %c0_9] : memref<16x32xbf16, #tpu.memory_space<vmem>>, vector<16x32xbf16>
    %c0_10 = arith.constant 0 : index
    %c0_11 = arith.constant 0 : index
    %8 = vector.load %arg6[%c0_10, %c0_11] : memref<32x128xbf16, #tpu.memory_space<vmem>>, vector<32x128xbf16>
    %cst_12 = arith.constant dense<0.000000e+00> : vector<16x128xf32>
    %9 = tpu.matmul %7, %8, %cst_12 {dimension_numbers = #tpu.dot_dimension_numbers<[1], [0], [0], [1], [0, 0, 1, 1], [], []>} : vector<16x32xbf16>, vector<32x128xbf16>, vector<16x128xf32> -> vector<16x128xf32>
    %10 = arith.addf %6, %9 : vector<16x128xf32>
    %c0_13 = arith.constant 0 : index
    %c0_14 = arith.constant 0 : index
    %11 = vector.load %arg7[%c0_13, %c0_14] : memref<1x128xf32, #tpu.memory_space<vmem>>, vector<1x128xf32>
    %12 = vector.broadcast %11 : vector<1x128xf32> to vector<16x128xf32>
    %13 = arith.addf %10, %12 : vector<16x128xf32>
    %c0_15 = arith.constant 0 : index
    %c0_16 = arith.constant 0 : index
    %14 = vector.load %arg8[%c0_15, %c0_16] : memref<16x128xf32, #tpu.memory_space<vmem>>, vector<16x128xf32>
    tpu.vector_store %arg8[%c0_15, %c0_16], %13 {strides = array<i32>} : memref<16x128xf32, #tpu.memory_space<vmem>>, vector<16x128xf32>,
    return
  }
  func.func @transform_0(%arg0: i32) -> (i32, i32) {
    %c0_i32 = arith.constant 0 : i32
    %c0_i32_0 = arith.constant 0 : i32
    return %arg0, %c0_i32 : i32, i32
  }
  func.func @transform_1(%arg0: i32) -> (i32, i32) {
    %c0_i32 = arith.constant 0 : i32
    %c0_i32_0 = arith.constant 0 : i32
    return %arg0, %c0_i32 : i32, i32
  }
  func.func @transform_2(%arg0: i32) -> (i32, i32) {
    %c0_i32 = arith.constant 0 : i32
    %c0_i32_0 = arith.constant 0 : i32
    return %arg0, %c0_i32 : i32, i32
  }
  func.func @transform_3(%arg0: i32) -> (i32, i32) {
    %c0_i32 = arith.constant 0 : i32
    %c0_i32_0 = arith.constant 0 : i32
    %c0_i32_1 = arith.constant 0 : i32
    return %c0_i32, %c0_i32_0 : i32, i32
  }
  func.func @transform_4(%arg0: i32) -> (i32, i32) {
    %c0_i32 = arith.constant 0 : i32
    %c0_i32_0 = arith.constant 0 : i32
    %c0_i32_1 = arith.constant 0 : i32
    return %c0_i32, %c0_i32_0 : i32, i32
  }
  func.func @transform_5(%arg0: i32) -> (i32, i32) {
    %c0_i32 = arith.constant 0 : i32
    %c0_i32_0 = arith.constant 0 : i32
    %c0_i32_1 = arith.constant 0 : i32
    return %c0_i32, %c0_i32_0 : i32, i32
  }
  func.func @transform_6(%arg0: i32) -> (i32, i32) {
    %c0_i32 = arith.constant 0 : i32
    %c0_i32_0 = arith.constant 0 : i32
    %c0_i32_1 = arith.constant 0 : i32
    return %c0_i32, %c0_i32_0 : i32, i32
  }
  func.func @transform_7(%arg0: i32) -> (i32, i32) {
    %c0_i32 = arith.constant 0 : i32
    %c0_i32_0 = arith.constant 0 : i32
    return %arg0, %c0_i32 : i32, i32
  }
}

module attributes {stable_mosaic.version = 11 : i64} {
  func.func @_fused_heads_kernel(%arg0: i32, %arg1: memref<16x32xbf16, #tpu.memory_space<vmem>>, %arg2: memref<16x32xbf16, #tpu.memory_space<vmem>>, %arg3: memref<16x32xbf16, #tpu.memory_space<vmem>>, %arg4: memref<32x128xbf16, #tpu.memory_space<vmem>>, %arg5: memref<32x128xbf16, #tpu.memory_space<vmem>>, %arg6: memref<32x128xbf16, #tpu.memory_space<vmem>>, %arg7: memref<1x128xf32, #tpu.memory_space<vmem>>, %arg8: memref<16x128xf32, #tpu.memory_space<vmem>>) attributes {dimension_semantics = [#tpu.dimension_semantics<parallel>], iteration_bounds = array<i64: 1>, scalar_prefetch = 0 : i64, scratch_operands = 0 : i64, tpu.core_type = #tpu.core_type<tc>, window_params = [{transform_indices = @transform_0, window_bounds = array<i64: 16, 32>}, {transform_indices = @transform_1, window_bounds = array<i64: 16, 32>}, {transform_indices = @transform_2, window_bounds = array<i64: 16, 32>}, {pipeline_mode = #tpu.pipeline_mode<synchronous>, transform_indices = @transform_3, window_bounds = array<i64: 32, 128>}, {pipeline_mode = #tpu.pipeline_mode<synchronous>, transform_indices = @transform_4, window_bounds = array<i64: 32, 128>}, {pipeline_mode = #tpu.pipeline_mode<synchronous>, transform_indices = @transform_5, window_bounds = array<i64: 32, 128>}, {pipeline_mode = #tpu.pipeline_mode<synchronous>, transform_indices = @transform_6, window_bounds = array<i64: 1, 128>}, {transform_indices = @transform_7, window_bounds = array<i64: 16, 128>}]} {
    %c0 = arith.constant 0 : index
    %c0_0 = arith.constant 0 : index
    %0 = vector.load %arg1[%c0, %c0_0] : memref<16x32xbf16, #tpu.memory_space<vmem>>, vector<16x32xbf16>
    %c0_1 = arith.constant 0 : index
    %c0_2 = arith.constant 0 : index
    %1 = vector.load %arg4[%c0_1, %c0_2] : memref<32x128xbf16, #tpu.memory_space<vmem>>, vector<32x128xbf16>
    %cst = arith.constant dense<0.000000e+00> : vector<16x128xf32>
    %2 = tpu.matmul %0, %1, %cst {dimension_numbers = #tpu.dot_dimension_numbers<[1], [0], [0], [1], [0, 0, 1, 1], [], []>} : vector<16x32xbf16>, vector<32x128xbf16>, vector<16x128xf32> -> vector<16x128xf32>
    %c0_3 = arith.constant 0 : index
    %c0_4 = arith.constant 0 : index
    %3 = vector.load %arg2[%c0_3, %c0_4] : memref<16x32xbf16, #tpu.memory_space<vmem>>, vector<16x32xbf16>
    %c0_5 = arith.constant 0 : index
    %c0_6 = arith.constant 0 : index
    %4 = vector.load %arg5[%c0_5, %c0_6] : memref<32x128xbf16, #tpu.memory_space<vmem>>, vector<32x128xbf16>
    %cst_7 = arith.constant dense<0.000000e+00> : vector<16x128xf32>
    %5 = tpu.matmul %3, %4, %cst_7 {dimension_numbers = #tpu.dot_dimension_numbers<[1], [0], [0], [1], [0, 0, 1, 1], [], []>} : vector<16x32xbf16>, vector<32x128xbf16>, vector<16x128xf32> -> vector<16x128xf32>
    %6 = arith.addf %2, %5 : vector<16x128xf32>
    %c0_8 = arith.constant 0 : index
    %c0_9 = arith.constant 0 : index
    %7 = vector.load %arg3[%c0_8, %c0_9] : memref<16x32xbf16, #tpu.memory_space<vmem>>, vector<16x32xbf16>
    %c0_10 = arith.constant 0 : index
    %c0_11 = arith.constant 0 : index
    %8 = vector.load %arg6[%c0_10, %c0_11] : memref<32x128xbf16, #tpu.memory_space<vmem>>, vector<32x128xbf16>
    %cst_12 = arith.constant dense<0.000000e+00> : vector<16x128xf32>
    %9 = tpu.matmul %7, %8, %cst_12 {dimension_numbers = #tpu.dot_dimension_numbers<[1], [0], [0], [1], [0, 0, 1, 1], [], []>} : vector<16x32xbf16>, vector<32x128xbf16>, vector<16x128xf32> -> vector<16x128xf32>
    %10 = arith.addf %6, %9 : vector<16x128xf32>
    %c0_13 = arith.constant 0 : index
    %c0_14 = arith.constant 0 : index
    %11 = vector.load %arg7[%c0_13, %c0_14] : memref<1x128xf32, #tpu.memory_space<vmem>>, vector<1x128xf32>
    %12 = vector.broadcast %11 : vector<1x128xf32> to vector<16x128xf32>
    %13 = arith.addf %10, %12 : vector<16x128xf32>
    %c0_15 = arith.constant 0 : index
    %c0_16 = arith.constant 0 : index
    %14 = vector.load %arg8[%c0_15, %c0_16] : memref<16x128xf32, #tpu.memory_space<vmem>>, vector<16x128xf32>
    tpu.vector_store %arg8[%c0_15, %c0_16], %13 {strides = array<i32>} : memref<16x128xf32, #tpu.memory_space<vmem>>, vector<16x128xf32>,
    return
  }
  func.func @transform_0(%arg0: i32) -> (i32, i32) {
    %c0_i32 = arith.constant 0 : i32
    %c0_i32_0 = arith.constant 0 : i32
    return %arg0, %c0_i32 : i32, i32
  }
  func.func @transform_1(%arg0: i32) -> (i32, i32) {
    %c0_i32 = arith.constant 0 : i32
    %c0_i32_0 = arith.constant 0 : i32
    return %arg0, %c0_i32 : i32, i32
  }
  func.func @transform_2(%arg0: i32) -> (i32, i32) {
    %c0_i32 = arith.constant 0 : i32
    %c0_i32_0 = arith.constant 0 : i32
    return %arg0, %c0_i32 : i32, i32
  }
  func.func @transform_3(%arg0: i32) -> (i32, i32) {
    %c0_i32 = arith.constant 0 : i32
    %c0_i32_0 = arith.constant 0 : i32
    %c0_i32_1 = arith.constant 0 : i32
    return %c0_i32, %c0_i32_0 : i32, i32
  }
  func.func @transform_4(%arg0: i32) -> (i32, i32) {
    %c0_i32 = arith.constant 0 : i32
    %c0_i32_0 = arith.constant 0 : i32
    %c0_i32_1 = arith.constant 0 : i32
    return %c0_i32, %c0_i32_0 : i32, i32
  }
  func.func @transform_5(%arg0: i32) -> (i32, i32) {
    %c0_i32 = arith.constant 0 : i32
    %c0_i32_0 = arith.constant 0 : i32
    %c0_i32_1 = arith.constant 0 : i32
    return %c0_i32, %c0_i32_0 : i32, i32
  }
  func.func @transform_6(%arg0: i32) -> (i32, i32) {
    %c0_i32 = arith.constant 0 : i32
    %c0_i32_0 = arith.constant 0 : i32
    %c0_i32_1 = arith.constant 0 : i32
    return %c0_i32, %c0_i32_0 : i32, i32
  }
  func.func @transform_7(%arg0: i32) -> (i32, i32) {
    %c0_i32 = arith.constant 0 : i32
    %c0_i32_0 = arith.constant 0 : i32
    return %arg0, %c0_i32 : i32, i32
  }
}

</mosaic_0001>

<llo_original>
// kernel: tpu_custom_call.1
$region0: #{tpu_custom_call.1}
  #allocation0 [shape = 'u32[]', space=smem, size = 0x4, offset = 0x4, fixed_abs, tag = 'smem constant byte address 0x4 - core index']
  #allocation1 [shape = 'u32[144,128]{1,0:T(1,128)}', space=vmem, size = 0x12000, scoped, tag = 'internal scratch']
  %s0 = inlined_call_operand.hbm [shape: bf16[16,32], index: 0, kind: input, shape index: {}]
  %s1 = inlined_call_operand.hbm [shape: bf16[16,32], index: 1, kind: input, shape index: {}]
  %s2 = inlined_call_operand.hbm [shape: bf16[16,32], index: 2, kind: input, shape index: {}]
  %s3 = inlined_call_operand.hbm [shape: bf16[32,128], index: 3, kind: input, shape index: {}]
  %s4 = inlined_call_operand.hbm [shape: bf16[32,128], index: 4, kind: input, shape index: {}]
  %s5 = inlined_call_operand.hbm [shape: bf16[32,128], index: 5, kind: input, shape index: {}]
  %s6 = inlined_call_operand.vmem [shape: f32[1,128], index: 6, kind: input, shape index: {}]
  %s7 = inlined_call_operand.hbm [shape: f32[16,128], index: 7, kind: output, shape index: {}]
  %s8 = sld [smem:[#allocation0]]
  $region62: #{tpu_custom_call.1} parent=0
    _
  %s10 = ssub.s32 1, %s8
  %s11 = scalar_select 0, %s10, %s8
  $region1: #{tpu_custom_call.1} parent=0
    #allocation2 [shape = 'u8[4096]{0}', space=vmem, size = 0x1000, scoped, tag = 'input window, operand 0, single buffered']
    #allocation3 [shape = 's32[1]{0}', space=sflag, size = 0x4, scoped, tag = 'scoped memory for tpu_custom_call.1']
    #allocation4 [shape = 's32[1]{0}', space=sflag, size = 0x4, scoped, tag = 'scoped memory for tpu_custom_call.1']
    #allocation5 [shape = 'u8[4096]{0}', space=vmem, size = 0x1000, scoped, tag = 'input window, operand 1, single buffered']
    #allocation6 [shape = 's32[1]{0}', space=sflag, size = 0x4, scoped, tag = 'scoped memory for tpu_custom_call.1']
    #allocation7 [shape = 'u8[4096]{0}', space=vmem, size = 0x1000, scoped, tag = 'input window, operand 2, single buffered']
    #allocation8 [shape = 'u8[8192]{0}', space=vmem, size = 0x2000, scoped, tag = 'input window, operand 3, single buffered']
    #allocation9 [shape = 's32[1]{0}', space=sflag, size = 0x4, scoped, tag = 'scoped memory for tpu_custom_call.1']
    #allocation10 [shape = 'u8[8192]{0}', space=vmem, size = 0x2000, scoped, tag = 'input window, operand 4, single buffered']
    #allocation11 [shape = 'u8[8192]{0}', space=vmem, size = 0x2000, scoped, tag = 'input window, operand 5, single buffered']
    #allocation12 [shape = 's32[1]{0}', space=sflag, size = 0x4, scoped, tag = 'scoped memory for tpu_custom_call.1']
    #allocation13 [shape = 'u8[8192]{0}', space=vmem, size = 0x2000, scoped, tag = 'output window, operand 0, single buffered']
    %12 = vsyncpa [#allocation3], 0
    %13 = vsyncpa [#allocation6], 0
    %14 = vsyncpa [#allocation9], 0
    %15 = vsyncpa [#allocation12], 0
    %16 = vsyncpa [#allocation4], 0
    // Predicated region
    $region2: #{tpu_custom_call.1} parent=1 // pred_check
      _
    $region3: #{tpu_custom_call.1} parent=1 // pred_check_branch
      %18 = sbr.rel (0) target = $region5
    $region4: #{tpu_custom_call.1} parent=1 // pred_region
      %s20 = ssub.s32 128, 128
      %21 = vsyncadd [#allocation3], %s20
      %s22 = sshll.u32 [#allocation2], 4
      %s23 = int_to_ptr.vmem [resolvable:$true] %s22
      %28 = dma.hbm_to_vmem [thread:$0]  %s0, 128, %s23, [#allocation3], 64, 64, 4
    $region5: #{tpu_custom_call.1} parent=1 // pred_fallthru
      _
    // Predicated region
    $region6: #{tpu_custom_call.1} parent=1 // pred_check
      _
    $region7: #{tpu_custom_call.1} parent=1 // pred_check_branch
      %30 = sbr.rel (0) target = $region9
    $region8: #{tpu_custom_call.1} parent=1 // pred_region
      %s32 = ssub.s32 128, 128
      %33 = vsyncadd [#allocation6], %s32
      %s34 = sshll.u32 [#allocation5], 4
      %s35 = int_to_ptr.vmem [resolvable:$true] %s34
      %40 = dma.hbm_to_vmem [thread:$0]  %s1, 128, %s35, [#allocation6], 64, 64, 4
    $region9: #{tpu_custom_call.1} parent=1 // pred_fallthru
      _
    // Predicated region
    $region10: #{tpu_custom_call.1} parent=1 // pred_check
      _
    $region11: #{tpu_custom_call.1} parent=1 // pred_check_branch
      %42 = sbr.rel (0) target = $region13
    $region12: #{tpu_custom_call.1} parent=1 // pred_region
      %s44 = ssub.s32 128, 128
      %45 = vsyncadd [#allocation6], %s44
      %s46 = sshll.u32 [#allocation7], 4
      %s47 = int_to_ptr.vmem [resolvable:$true] %s46
      %52 = dma.hbm_to_vmem [thread:$0]  %s2, 128, %s47, [#allocation6], 64, 64, 4
    $region13: #{tpu_custom_call.1} parent=1 // pred_fallthru
      _
    // Predicated region
    $region14: #{tpu_custom_call.1} parent=1 // pred_check
      _
    $region15: #{tpu_custom_call.1} parent=1 // pred_check_branch
      %54 = sbr.rel (0) target = $region17
    $region16: #{tpu_custom_call.1} parent=1 // pred_region
      %s56 = ssub.s32 256, 256
      %57 = vsyncadd [#allocation9], %s56
      %s58 = sshll.u32 [#allocation8], 4
      %s59 = int_to_ptr.vmem [resolvable:$true] %s58
      %64 = dma.hbm_to_vmem [thread:$0]  %s3, 256, %s59, [#allocation9], 64, 64, 4
    $region17: #{tpu_custom_call.1} parent=1 // pred_fallthru
      _
    // Predicated region
    $region18: #{tpu_custom_call.1} parent=1 // pred_check
      _
    $region19: #{tpu_custom_call.1} parent=1 // pred_check_branch
      %66 = sbr.rel (0) target = $region21
    $region20: #{tpu_custom_call.1} parent=1 // pred_region
      %s68 = ssub.s32 256, 256
      %69 = vsyncadd [#allocation9], %s68
      %s70 = sshll.u32 [#allocation10], 4
      %s71 = int_to_ptr.vmem [resolvable:$true] %s70
      %76 = dma.hbm_to_vmem [thread:$0]  %s4, 256, %s71, [#allocation9], 64, 64, 4
    $region21: #{tpu_custom_call.1} parent=1 // pred_fallthru
      _
    // Predicated region
    $region22: #{tpu_custom_call.1} parent=1 // pred_check
      _
    $region23: #{tpu_custom_call.1} parent=1 // pred_check_branch
      %78 = sbr.rel (0) target = $region25
    $region24: #{tpu_custom_call.1} parent=1 // pred_region
      %s80 = ssub.s32 256, 256
      %81 = vsyncadd [#allocation12], %s80
      %s82 = sshll.u32 [#allocation11], 4
      %s83 = int_to_ptr.vmem [resolvable:$true] %s82
      %88 = dma.hbm_to_vmem [thread:$0]  %s5, 256, %s83, [#allocation12], 64, 64, 4
    $region25: #{tpu_custom_call.1} parent=1 // pred_fallthru
      _
    // Predicated region
    $region26: #{tpu_custom_call.1} parent=1 // pred_check
      _
    $region27: #{tpu_custom_call.1} parent=1 // pred_check_branch
      %90 = sbr.rel (0) target = $region29
    $region28: #{tpu_custom_call.1} parent=1 // pred_region
      _
    $region29: #{tpu_custom_call.1} parent=1 // pred_fallthru
      _
    // Predicated region
    $region30: #{tpu_custom_call.1} parent=1 // pred_check
      _
    $region31: #{tpu_custom_call.1} parent=1 // pred_check_branch
      %92 = sbr.rel (0) target = $region33
    $region32: #{tpu_custom_call.1} parent=1 // pred_region
      %93 = dma.done [#allocation3], 128
    $region33: #{tpu_custom_call.1} parent=1 // pred_fallthru
      _
    // Predicated region
    $region34: #{tpu_custom_call.1} parent=1 // pred_check
      _
    $region35: #{tpu_custom_call.1} parent=1 // pred_check_branch
      %95 = sbr.rel (0) target = $region37
    $region36: #{tpu_custom_call.1} parent=1 // pred_region
      %96 = dma.done [#allocation6], 128
    $region37: #{tpu_custom_call.1} parent=1 // pred_fallthru
      _
    // Predicated region
    $region38: #{tpu_custom_call.1} parent=1 // pred_check
      _
    $region39: #{tpu_custom_call.1} parent=1 // pred_check_branch
      %98 = sbr.rel (0) target = $region41
    $region40: #{tpu_custom_call.1} parent=1 // pred_region
      %99 = dma.done [#allocation6], 128
    $region41: #{tpu_custom_call.1} parent=1 // pred_fallthru
      _
    // Predicated region
    $region42: #{tpu_custom_call.1} parent=1 // pred_check
      _
    $region43: #{tpu_custom_call.1} parent=1 // pred_check_branch
      %101 = sbr.rel (0) target = $region45
    $region44: #{tpu_custom_call.1} parent=1 // pred_region
      %102 = dma.done [#allocation9], 256
    $region45: #{tpu_custom_call.1} parent=1 // pred_fallthru
      _
    // Predicated region
    $region46: #{tpu_custom_call.1} parent=1 // pred_check
      _
    $region47: #{tpu_custom_call.1} parent=1 // pred_check_branch
      %104 = sbr.rel (0) target = $region49
    $region48: #{tpu_custom_call.1} parent=1 // pred_region
      %105 = dma.done [#allocation9], 256
    $region49: #{tpu_custom_call.1} parent=1 // pred_fallthru
      _
    // Predicated region
    $region50: #{tpu_custom_call.1} parent=1 // pred_check
      _
    $region51: #{tpu_custom_call.1} parent=1 // pred_check_branch
      %107 = sbr.rel (0) target = $region53
    $region52: #{tpu_custom_call.1} parent=1 // pred_region
      %108 = dma.done [#allocation12], 256
    $region53: #{tpu_custom_call.1} parent=1 // pred_fallthru
      _
    %v110 = vld [vmem:[#allocation2] sm:$0xf]
    %v111 = vld [vmem:[#allocation2 + $0x4] sm:$0xf]
    %v112 = vld [vmem:[#allocation8] sm:$0xf]
    %v113 = vld [vmem:[#allocation8 + $0x4] sm:$0xf]
    %v114 = vld [vmem:[#allocation8 + $0x8] sm:$0xf]
    %v115 = vld [vmem:[#allocation8 + $0xc] sm:$0xf]
    %v116 = vld [vmem:[#allocation5] sm:$0xf]
    %v117 = vld [vmem:[#allocation5 + $0x4] sm:$0xf]
    %v118 = vld [vmem:[#allocation10] sm:$0xf]
    %v119 = vld [vmem:[#allocation10 + $0x4] sm:$0xf]
    %v120 = vld [vmem:[#allocation10 + $0x8] sm:$0xf]
    %v121 = vld [vmem:[#allocation10 + $0xc] sm:$0xf]
    %v124 = vunpack.c.l.b16 %v116
    %v125 = vunpack.c.l.b16 %v117
    %v126 = vpack.c.b16 %v125, %v124
    %v131 = vunpack.c.l.b16 %v118
    %v132 = vunpack.c.l.b16 %v119
    %v133 = vunpack.c.l.b16 %v120
    %v134 = vunpack.c.l.b16 %v121
    %v135 = vpack.c.b16 %v132, %v131
    %v136 = vpack.c.b16 %v134, %v133
    %vm139 = vcmask 261120
    %v141 = vsel %vm139, %v126, 0
    %143 = vmatprep.subr.bf16.mxu0 0
    %144 = vmatpush1.bf16.msra.mxu0 0
    %145 = vmatprep.subr.bf16.mxu0 0
    %146 = vmatpush1.bf16.msra.mxu0 0
    %147 = vmatprep.subr.bf16.mxu0 0
    %148 = vmatpush1.bf16.msra.mxu0 0
    %149 = vmatprep.subr.bf16.mxu0 0
    %150 = vmatpush1.bf16.msra.mxu0 0
    %151 = vmatprep.subr.bf16.mxu0 0
    %152 = vmatpush1.bf16.msra.mxu0 0
    %153 = vmatprep.subr.bf16.mxu0 0
    %154 = vmatpush1.bf16.msra.mxu0 0
    %155 = vmatprep.subr.bf16.mxu0 0
    %156 = vmatpush1.bf16.msra.mxu0 %v136
    %157 = vmatprep.subr.bf16.mxu0 0
    %158 = vmatpush1.bf16.msra.mxu0 %v135
    %159 = vmatprep.subr.bf16.mxu0 0
    %160 = vmatpush2.bf16.msra.mxu0 0
    %161 = vmatprep.subr.bf16.mxu0 0
    %162 = vmatpush2.bf16.msra.mxu0 0
    %163 = vmatprep.subr.bf16.mxu0 0
    %164 = vmatpush2.bf16.msra.mxu0 0
    %165 = vmatprep.subr.bf16.mxu0 0
    %166 = vmatpush2.bf16.msra.mxu0 0
    %167 = vmatprep.subr.bf16.mxu0 0
    %168 = vmatpush2.bf16.msra.mxu0 0
    %169 = vmatprep.subr.bf16.mxu0 0
    %170 = vmatpush2.bf16.msra.mxu0 0
    %171 = vmatprep.subr.bf16.mxu0 0
    %172 = vmatpush2.bf16.msra.mxu0 0
    %173 = vmatprep.subr.bf16.mxu0 0
    %174 = vmatpush2.bf16.msra.mxu0 0
    %175 = vmatprep.mubr.bf16.mxu0 0
    %176 = vmatmul.mubr.bf16.gmra.mxu0 %v141
    %v177 = vpop.f32.mrf.mxu0
    %v178 = vadd.f32 0.0, %v177
    %v179 = vpop.f32.mrf.mxu0
    %v180 = vpop.f32.mrf.mxu0
    %v181 = vadd.f32 0.0, %v180
    %v182 = vpop.f32.mrf.mxu0
    %183 = vdwg.mxu0
    %v186 = vunpack.c.l.b16 %v110
    %v187 = vunpack.c.l.b16 %v111
    %v188 = vpack.c.b16 %v187, %v186
    %v193 = vunpack.c.l.b16 %v112
    %v194 = vunpack.c.l.b16 %v113
    %v195 = vunpack.c.l.b16 %v114
    %v196 = vunpack.c.l.b16 %v115
    %v197 = vpack.c.b16 %v194, %v193
    %v198 = vpack.c.b16 %v196, %v195
    %v202 = vsel %vm139, %v188, 0
    %204 = vmatprep.subr.bf16.mxu0 0
    %205 = vmatpush1.bf16.msra.mxu0 0
    %206 = vmatprep.subr.bf16.mxu0 0
    %207 = vmatpush1.bf16.msra.mxu0 0
    %208 = vmatprep.subr.bf16.mxu0 0
    %209 = vmatpush1.bf16.msra.mxu0 0
    %210 = vmatprep.subr.bf16.mxu0 0
    %211 = vmatpush1.bf16.msra.mxu0 0
    %212 = vmatprep.subr.bf16.mxu0 0
    %213 = vmatpush1.bf16.msra.mxu0 0
    %214 = vmatprep.subr.bf16.mxu0 0
    %215 = vmatpush1.bf16.msra.mxu0 0
    %216 = vmatprep.subr.bf16.mxu0 0
    %217 = vmatpush1.bf16.msra.mxu0 %v198
    %218 = vmatprep.subr.bf16.mxu0 0
    %219 = vmatpush1.bf16.msra.mxu0 %v197
    %220 = vmatprep.subr.bf16.mxu0 0
    %221 = vmatpush2.bf16.msra.mxu0 0
    %222 = vmatprep.subr.bf16.mxu0 0
    %223 = vmatpush2.bf16.msra.mxu0 0
    %224 = vmatprep.subr.bf16.mxu0 0
    %225 = vmatpush2.bf16.msra.mxu0 0
    %226 = vmatprep.subr.bf16.mxu0 0
    %227 = vmatpush2.bf16.msra.mxu0 0
    %228 = vmatprep.subr.bf16.mxu0 0
    %229 = vmatpush2.bf16.msra.mxu0 0
    %230 = vmatprep.subr.bf16.mxu0 0
    %231 = vmatpush2.bf16.msra.mxu0 0
    %232 = vmatprep.subr.bf16.mxu0 0
    %233 = vmatpush2.bf16.msra.mxu0 0
    %234 = vmatprep.subr.bf16.mxu0 0
    %235 = vmatpush2.bf16.msra.mxu0 0
    %236 = vmatprep.mubr.bf16.mxu0 0
    %237 = vmatmul.mubr.bf16.gmra.mxu0 %v202
    %v238 = vpop.f32.mrf.mxu0
    %v239 = vadd.f32 %v178, %v238
    %v240 = vpop.f32.mrf.mxu0
    %v241 = vpop.f32.mrf.mxu0
    %v242 = vadd.f32 %v181, %v241
    %v243 = vpop.f32.mrf.mxu0
    %244 = vdwg.mxu0
    %v245 = vld [vmem:[#allocation7] sm:$0xf]
    %v246 = vld [vmem:[#allocation7 + $0x4] sm:$0xf]
    %v247 = vld [vmem:[#allocation11] sm:$0xf]
    %v248 = vld [vmem:[#allocation11 + $0x4] sm:$0xf]
    %v249 = vld [vmem:[#allocation11 + $0x8] sm:$0xf]
    %v250 = vld [vmem:[#allocation11 + $0xc] sm:$0xf]
    %v253 = vunpack.c.l.b16 %v245
    %v254 = vunpack.c.l.b16 %v246
    %v255 = vpack.c.b16 %v254, %v253
    %v260 = vunpack.c.l.b16 %v247
    %v261 = vunpack.c.l.b16 %v248
    %v262 = vunpack.c.l.b16 %v249
    %v263 = vunpack.c.l.b16 %v250
    %v264 = vpack.c.b16 %v261, %v260
    %v265 = vpack.c.b16 %v263, %v262
    %v269 = vsel %vm139, %v255, 0
    %271 = vmatprep.subr.bf16.mxu0 0
    %272 = vmatpush1.bf16.msra.mxu0 0
    %273 = vmatprep.subr.bf16.mxu0 0
    %274 = vmatpush1.bf16.msra.mxu0 0
    %275 = vmatprep.subr.bf16.mxu0 0
    %276 = vmatpush1.bf16.msra.mxu0 0
    %277 = vmatprep.subr.bf16.mxu0 0
    %278 = vmatpush1.bf16.msra.mxu0 0
    %279 = vmatprep.subr.bf16.mxu0 0
    %280 = vmatpush1.bf16.msra.mxu0 0
    %281 = vmatprep.subr.bf16.mxu0 0
    %282 = vmatpush1.bf16.msra.mxu0 0
    %283 = vmatprep.subr.bf16.mxu0 0
    %284 = vmatpush1.bf16.msra.mxu0 %v265
    %285 = vmatprep.subr.bf16.mxu0 0
    %286 = vmatpush1.bf16.msra.mxu0 %v264
    %287 = vmatprep.subr.bf16.mxu0 0
    %288 = vmatpush2.bf16.msra.mxu0 0
    %289 = vmatprep.subr.bf16.mxu0 0
    %290 = vmatpush2.bf16.msra.mxu0 0
    %291 = vmatprep.subr.bf16.mxu0 0
    %292 = vmatpush2.bf16.msra.mxu0 0
    %293 = vmatprep.subr.bf16.mxu0 0
    %294 = vmatpush2.bf16.msra.mxu0 0
    %295 = vmatprep.subr.bf16.mxu0 0
    %296 = vmatpush2.bf16.msra.mxu0 0
    %297 = vmatprep.subr.bf16.mxu0 0
    %298 = vmatpush2.bf16.msra.mxu0 0
    %299 = vmatprep.subr.bf16.mxu0 0
    %300 = vmatpush2.bf16.msra.mxu0 0
    %301 = vmatprep.subr.bf16.mxu0 0
    %302 = vmatpush2.bf16.msra.mxu0 0
    %303 = vmatprep.mubr.bf16.mxu0 0
    %304 = vmatmul.mubr.bf16.gmra.mxu0 %v269
    %v305 = vpop.f32.mrf.mxu0
    %v306 = vadd.f32 0.0, %v305
    %v307 = vpop.f32.mrf.mxu0
    %v308 = vpop.f32.mrf.mxu0
    %v309 = vadd.f32 0.0, %v308
    %v310 = vpop.f32.mrf.mxu0
    %311 = vdwg.mxu0
    %v312 = vadd.f32 %v239, %v306
    %v313 = vadd.f32 %v242, %v309
    %v314 = vld [vmem:[%s6] sm:$0x1]
    %v316 = vlaneseq
    %v317 = vshrl.u32 %v316, 7
    %v318 = vsub.s32 0, %v317
    %v319 = vrot.slane %v314, %v318
    %v321 = vadd.f32 %v312, %v319
    %v322 = vadd.f32 %v313, %v319
    %323 = vst [vmem:[#allocation13] sm:$0xff] %v321
    %324 = vst [vmem:[#allocation13 + $0x8] sm:$0xff] %v322
    // Predicated region
    $region54: #{tpu_custom_call.1} parent=1 // pred_check
      _
    $region55: #{tpu_custom_call.1} parent=1 // pred_check_branch
      %326 = sbr.rel (0) target = $region57
    $region56: #{tpu_custom_call.1} parent=1 // pred_region
      %s328 = ssub.s32 256, 256
      %329 = vsyncadd [#allocation4], %s328
      %s330 = sshll.u32 [#allocation13], 4
      %s331 = int_to_ptr.vmem [resolvable:$true] %s330
      %336 = dma.vmem_to_hbm [thread:$0]  %s331, 256, %s7, [#allocation4], 128, 128, 8
    $region57: #{tpu_custom_call.1} parent=1 // pred_fallthru
      _
    // Predicated region
    $region58: #{tpu_custom_call.1} parent=1 // pred_check
      _
    $region59: #{tpu_custom_call.1} parent=1 // pred_check_branch
      %338 = sbr.rel (0) target = $region61
    $region60: #{tpu_custom_call.1} parent=1 // pred_region
      %339 = dma.done [#allocation4], 256
    $region61: #{tpu_custom_call.1} parent=1 // pred_fallthru
      _
    %340 = vsyncpa [#allocation3], 1
    %341 = vsyncpa [#allocation6], 1
    %342 = vsyncpa [#allocation9], 1
    %343 = vsyncpa [#allocation12], 1
    %344 = vsyncpa [#allocation4], 1

// kernel: tpu_custom_call.1
$region0: #{tpu_custom_call.1}
  #allocation0 [shape = 'u32[]', space=smem, size = 0x4, offset = 0x4, fixed_abs, tag = 'smem constant byte address 0x4 - core index']
  #allocation1 [shape = 'u32[144,128]{1,0:T(1,128)}', space=vmem, size = 0x12000, scoped, tag = 'internal scratch']
  %s0 = inlined_call_operand.hbm [shape: bf16[16,32], index: 0, kind: input, shape index: {}]
  %s1 = inlined_call_operand.hbm [shape: bf16[16,32], index: 1, kind: input, shape index: {}]
  %s2 = inlined_call_operand.hbm [shape: bf16[16,32], index: 2, kind: input, shape index: {}]
  %s3 = inlined_call_operand.hbm [shape: bf16[32,128], index: 3, kind: input, shape index: {}]
  %s4 = inlined_call_operand.hbm [shape: bf16[32,128], index: 4, kind: input, shape index: {}]
  %s5 = inlined_call_operand.hbm [shape: bf16[32,128], index: 5, kind: input, shape index: {}]
  %s6 = inlined_call_operand.vmem [shape: f32[1,128], index: 6, kind: input, shape index: {}]
  %s7 = inlined_call_operand.hbm [shape: f32[16,128], index: 7, kind: output, shape index: {}]
  %s8 = sld [smem:[#allocation0]]
  $region62: #{tpu_custom_call.1} parent=0
    _
  %s10 = ssub.s32 1, %s8
  %s11 = scalar_select 0, %s10, %s8
  $region1: #{tpu_custom_call.1} parent=0
    #allocation2 [shape = 'u8[4096]{0}', space=vmem, size = 0x1000, scoped, tag = 'input window, operand 0, single buffered']
    #allocation3 [shape = 's32[1]{0}', space=sflag, size = 0x4, scoped, tag = 'scoped memory for tpu_custom_call.1']
    #allocation4 [shape = 's32[1]{0}', space=sflag, size = 0x4, scoped, tag = 'scoped memory for tpu_custom_call.1']
    #allocation5 [shape = 'u8[4096]{0}', space=vmem, size = 0x1000, scoped, tag = 'input window, operand 1, single buffered']
    #allocation6 [shape = 's32[1]{0}', space=sflag, size = 0x4, scoped, tag = 'scoped memory for tpu_custom_call.1']
    #allocation7 [shape = 'u8[4096]{0}', space=vmem, size = 0x1000, scoped, tag = 'input window, operand 2, single buffered']
    #allocation8 [shape = 'u8[8192]{0}', space=vmem, size = 0x2000, scoped, tag = 'input window, operand 3, single buffered']
    #allocation9 [shape = 's32[1]{0}', space=sflag, size = 0x4, scoped, tag = 'scoped memory for tpu_custom_call.1']
    #allocation10 [shape = 'u8[8192]{0}', space=vmem, size = 0x2000, scoped, tag = 'input window, operand 4, single buffered']
    #allocation11 [shape = 'u8[8192]{0}', space=vmem, size = 0x2000, scoped, tag = 'input window, operand 5, single buffered']
    #allocation12 [shape = 's32[1]{0}', space=sflag, size = 0x4, scoped, tag = 'scoped memory for tpu_custom_call.1']
    #allocation13 [shape = 'u8[8192]{0}', space=vmem, size = 0x2000, scoped, tag = 'output window, operand 0, single buffered']
    %12 = vsyncpa [#allocation3], 0
    %13 = vsyncpa [#allocation6], 0
    %14 = vsyncpa [#allocation9], 0
    %15 = vsyncpa [#allocation12], 0
    %16 = vsyncpa [#allocation4], 0
    // Predicated region
    $region2: #{tpu_custom_call.1} parent=1 // pred_check
      _
    $region3: #{tpu_custom_call.1} parent=1 // pred_check_branch
      %18 = sbr.rel (0) target = $region5
    $region4: #{tpu_custom_call.1} parent=1 // pred_region
      %s20 = ssub.s32 128, 128
      %21 = vsyncadd [#allocation3], %s20
      %s22 = sshll.u32 [#allocation2], 4
      %s23 = int_to_ptr.vmem [resolvable:$true] %s22
      %28 = dma.hbm_to_vmem [thread:$0]  %s0, 128, %s23, [#allocation3], 64, 64, 4
    $region5: #{tpu_custom_call.1} parent=1 // pred_fallthru
      _
    // Predicated region
    $region6: #{tpu_custom_call.1} parent=1 // pred_check
      _
    $region7: #{tpu_custom_call.1} parent=1 // pred_check_branch
      %30 = sbr.rel (0) target = $region9
    $region8: #{tpu_custom_call.1} parent=1 // pred_region
      %s32 = ssub.s32 128, 128
      %33 = vsyncadd [#allocation6], %s32
      %s34 = sshll.u32 [#allocation5], 4
      %s35 = int_to_ptr.vmem [resolvable:$true] %s34
      %40 = dma.hbm_to_vmem [thread:$0]  %s1, 128, %s35, [#allocation6], 64, 64, 4
    $region9: #{tpu_custom_call.1} parent=1 // pred_fallthru
      _
    // Predicated region
    $region10: #{tpu_custom_call.1} parent=1 // pred_check
      _
    $region11: #{tpu_custom_call.1} parent=1 // pred_check_branch
      %42 = sbr.rel (0) target = $region13
    $region12: #{tpu_custom_call.1} parent=1 // pred_region
      %s44 = ssub.s32 128, 128
      %45 = vsyncadd [#allocation6], %s44
      %s46 = sshll.u32 [#allocation7], 4
      %s47 = int_to_ptr.vmem [resolvable:$true] %s46
      %52 = dma.hbm_to_vmem [thread:$0]  %s2, 128, %s47, [#allocation6], 64, 64, 4
    $region13: #{tpu_custom_call.1} parent=1 // pred_fallthru
      _
    // Predicated region
    $region14: #{tpu_custom_call.1} parent=1 // pred_check
      _
    $region15: #{tpu_custom_call.1} parent=1 // pred_check_branch
      %54 = sbr.rel (0) target = $region17
    $region16: #{tpu_custom_call.1} parent=1 // pred_region
      %s56 = ssub.s32 256, 256
      %57 = vsyncadd [#allocation9], %s56
      %s58 = sshll.u32 [#allocation8], 4
      %s59 = int_to_ptr.vmem [resolvable:$true] %s58
      %64 = dma.hbm_to_vmem [thread:$0]  %s3, 256, %s59, [#allocation9], 64, 64, 4
    $region17: #{tpu_custom_call.1} parent=1 // pred_fallthru
      _
    // Predicated region
    $region18: #{tpu_custom_call.1} parent=1 // pred_check
      _
    $region19: #{tpu_custom_call.1} parent=1 // pred_check_branch
      %66 = sbr.rel (0) target = $region21
    $region20: #{tpu_custom_call.1} parent=1 // pred_region
      %s68 = ssub.s32 256, 256
      %69 = vsyncadd [#allocation9], %s68
      %s70 = sshll.u32 [#allocation10], 4
      %s71 = int_to_ptr.vmem [resolvable:$true] %s70
      %76 = dma.hbm_to_vmem [thread:$0]  %s4, 256, %s71, [#allocation9], 64, 64, 4
    $region21: #{tpu_custom_call.1} parent=1 // pred_fallthru
      _
    // Predicated region
    $region22: #{tpu_custom_call.1} parent=1 // pred_check
      _
    $region23: #{tpu_custom_call.1} parent=1 // pred_check_branch
      %78 = sbr.rel (0) target = $region25
    $region24: #{tpu_custom_call.1} parent=1 // pred_region
      %s80 = ssub.s32 256, 256
      %81 = vsyncadd [#allocation12], %s80
      %s82 = sshll.u32 [#allocation11], 4
      %s83 = int_to_ptr.vmem [resolvable:$true] %s82
      %88 = dma.hbm_to_vmem [thread:$0]  %s5, 256, %s83, [#allocation12], 64, 64, 4
    $region25: #{tpu_custom_call.1} parent=1 // pred_fallthru
      _
    // Predicated region
    $region26: #{tpu_custom_call.1} parent=1 // pred_check
      _
    $region27: #{tpu_custom_call.1} parent=1 // pred_check_branch
      %90 = sbr.rel (0) target = $region29
    $region28: #{tpu_custom_call.1} parent=1 // pred_region
      _
    $region29: #{tpu_custom_call.1} parent=1 // pred_fallthru
      _
    // Predicated region
    $region30: #{tpu_custom_call.1} parent=1 // pred_check
      _
    $region31: #{tpu_custom_call.1} parent=1 // pred_check_branch
      %92 = sbr.rel (0) target = $region33
    $region32: #{tpu_custom_call.1} parent=1 // pred_region
      %93 = dma.done [#allocation3], 128
    $region33: #{tpu_custom_call.1} parent=1 // pred_fallthru
      _
    // Predicated region
    $region34: #{tpu_custom_call.1} parent=1 // pred_check
      _
    $region35: #{tpu_custom_call.1} parent=1 // pred_check_branch
      %95 = sbr.rel (0) target = $region37
    $region36: #{tpu_custom_call.1} parent=1 // pred_region
      %96 = dma.done [#allocation6], 128
    $region37: #{tpu_custom_call.1} parent=1 // pred_fallthru
      _
    // Predicated region
    $region38: #{tpu_custom_call.1} parent=1 // pred_check
      _
    $region39: #{tpu_custom_call.1} parent=1 // pred_check_branch
      %98 = sbr.rel (0) target = $region41
    $region40: #{tpu_custom_call.1} parent=1 // pred_region
      %99 = dma.done [#allocation6], 128
    $region41: #{tpu_custom_call.1} parent=1 // pred_fallthru
      _
    // Predicated region
    $region42: #{tpu_custom_call.1} parent=1 // pred_check
      _
    $region43: #{tpu_custom_call.1} parent=1 // pred_check_branch
      %101 = sbr.rel (0) target = $region45
    $region44: #{tpu_custom_call.1} parent=1 // pred_region
      %102 = dma.done [#allocation9], 256
    $region45: #{tpu_custom_call.1} parent=1 // pred_fallthru
      _
    // Predicated region
    $region46: #{tpu_custom_call.1} parent=1 // pred_check
      _
    $region47: #{tpu_custom_call.1} parent=1 // pred_check_branch
      %104 = sbr.rel (0) target = $region49
    $region48: #{tpu_custom_call.1} parent=1 // pred_region
      %105 = dma.done [#allocation9], 256
    $region49: #{tpu_custom_call.1} parent=1 // pred_fallthru
      _
    // Predicated region
    $region50: #{tpu_custom_call.1} parent=1 // pred_check
      _
    $region51: #{tpu_custom_call.1} parent=1 // pred_check_branch
      %107 = sbr.rel (0) target = $region53
    $region52: #{tpu_custom_call.1} parent=1 // pred_region
      %108 = dma.done [#allocation12], 256
    $region53: #{tpu_custom_call.1} parent=1 // pred_fallthru
      _
    %v110 = vld [vmem:[#allocation2] sm:$0xf]
    %v111 = vld [vmem:[#allocation2 + $0x4] sm:$0xf]
    %v112 = vld [vmem:[#allocation8] sm:$0xf]
    %v113 = vld [vmem:[#allocation8 + $0x4] sm:$0xf]
    %v114 = vld [vmem:[#allocation8 + $0x8] sm:$0xf]
    %v115 = vld [vmem:[#allocation8 + $0xc] sm:$0xf]
    %v116 = vld [vmem:[#allocation5] sm:$0xf]
    %v117 = vld [vmem:[#allocation5 + $0x4] sm:$0xf]
    %v118 = vld [vmem:[#allocation10] sm:$0xf]
    %v119 = vld [vmem:[#allocation10 + $0x4] sm:$0xf]
    %v120 = vld [vmem:[#allocation10 + $0x8] sm:$0xf]
    %v121 = vld [vmem:[#allocation10 + $0xc] sm:$0xf]
    %v124 = vunpack.c.l.b16 %v116
    %v125 = vunpack.c.l.b16 %v117
    %v126 = vpack.c.b16 %v125, %v124
    %v131 = vunpack.c.l.b16 %v118
    %v132 = vunpack.c.l.b16 %v119
    %v133 = vunpack.c.l.b16 %v120
    %v134 = vunpack.c.l.b16 %v121
    %v135 = vpack.c.b16 %v132, %v131
    %v136 = vpack.c.b16 %v134, %v133
    %vm139 = vcmask 261120
    %v141 = vsel %vm139, %v126, 0
    %143 = vmatprep.subr.bf16.mxu0 0
    %144 = vmatpush1.bf16.msra.mxu0 0
    %145 = vmatprep.subr.bf16.mxu0 0
    %146 = vmatpush1.bf16.msra.mxu0 0
    %147 = vmatprep.subr.bf16.mxu0 0
    %148 = vmatpush1.bf16.msra.mxu0 0
    %149 = vmatprep.subr.bf16.mxu0 0
    %150 = vmatpush1.bf16.msra.mxu0 0
    %151 = vmatprep.subr.bf16.mxu0 0
    %152 = vmatpush1.bf16.msra.mxu0 0
    %153 = vmatprep.subr.bf16.mxu0 0
    %154 = vmatpush1.bf16.msra.mxu0 0
    %155 = vmatprep.subr.bf16.mxu0 0
    %156 = vmatpush1.bf16.msra.mxu0 %v136
    %157 = vmatprep.subr.bf16.mxu0 0
    %158 = vmatpush1.bf16.msra.mxu0 %v135
    %159 = vmatprep.subr.bf16.mxu0 0
    %160 = vmatpush2.bf16.msra.mxu0 0
    %161 = vmatprep.subr.bf16.mxu0 0
    %162 = vmatpush2.bf16.msra.mxu0 0
    %163 = vmatprep.subr.bf16.mxu0 0
    %164 = vmatpush2.bf16.msra.mxu0 0
    %165 = vmatprep.subr.bf16.mxu0 0
    %166 = vmatpush2.bf16.msra.mxu0 0
    %167 = vmatprep.subr.bf16.mxu0 0
    %168 = vmatpush2.bf16.msra.mxu0 0
    %169 = vmatprep.subr.bf16.mxu0 0
    %170 = vmatpush2.bf16.msra.mxu0 0
    %171 = vmatprep.subr.bf16.mxu0 0
    %172 = vmatpush2.bf16.msra.mxu0 0
    %173 = vmatprep.subr.bf16.mxu0 0
    %174 = vmatpush2.bf16.msra.mxu0 0
    %175 = vmatprep.mubr.bf16.mxu0 0
    %176 = vmatmul.mubr.bf16.gmra.mxu0 %v141
    %v177 = vpop.f32.mrf.mxu0
    %v178 = vadd.f32 0.0, %v177
    %v179 = vpop.f32.mrf.mxu0
    %v180 = vpop.f32.mrf.mxu0
    %v181 = vadd.f32 0.0, %v180
    %v182 = vpop.f32.mrf.mxu0
    %183 = vdwg.mxu0
    %v186 = vunpack.c.l.b16 %v110
    %v187 = vunpack.c.l.b16 %v111
    %v188 = vpack.c.b16 %v187, %v186
    %v193 = vunpack.c.l.b16 %v112
    %v194 = vunpack.c.l.b16 %v113
    %v195 = vunpack.c.l.b16 %v114
    %v196 = vunpack.c.l.b16 %v115
    %v197 = vpack.c.b16 %v194, %v193
    %v198 = vpack.c.b16 %v196, %v195
    %v202 = vsel %vm139, %v188, 0
    %204 = vmatprep.subr.bf16.mxu0 0
    %205 = vmatpush1.bf16.msra.mxu0 0
    %206 = vmatprep.subr.bf16.mxu0 0
    %207 = vmatpush1.bf16.msra.mxu0 0
    %208 = vmatprep.subr.bf16.mxu0 0
    %209 = vmatpush1.bf16.msra.mxu0 0
    %210 = vmatprep.subr.bf16.mxu0 0
    %211 = vmatpush1.bf16.msra.mxu0 0
    %212 = vmatprep.subr.bf16.mxu0 0
    %213 = vmatpush1.bf16.msra.mxu0 0
    %214 = vmatprep.subr.bf16.mxu0 0
    %215 = vmatpush1.bf16.msra.mxu0 0
    %216 = vmatprep.subr.bf16.mxu0 0
    %217 = vmatpush1.bf16.msra.mxu0 %v198
    %218 = vmatprep.subr.bf16.mxu0 0
    %219 = vmatpush1.bf16.msra.mxu0 %v197
    %220 = vmatprep.subr.bf16.mxu0 0
    %221 = vmatpush2.bf16.msra.mxu0 0
    %222 = vmatprep.subr.bf16.mxu0 0
    %223 = vmatpush2.bf16.msra.mxu0 0
    %224 = vmatprep.subr.bf16.mxu0 0
    %225 = vmatpush2.bf16.msra.mxu0 0
    %226 = vmatprep.subr.bf16.mxu0 0
    %227 = vmatpush2.bf16.msra.mxu0 0
    %228 = vmatprep.subr.bf16.mxu0 0
    %229 = vmatpush2.bf16.msra.mxu0 0
    %230 = vmatprep.subr.bf16.mxu0 0
    %231 = vmatpush2.bf16.msra.mxu0 0
    %232 = vmatprep.subr.bf16.mxu0 0
    %233 = vmatpush2.bf16.msra.mxu0 0
    %234 = vmatprep.subr.bf16.mxu0 0
    %235 = vmatpush2.bf16.msra.mxu0 0
    %236 = vmatprep.mubr.bf16.mxu0 0
    %237 = vmatmul.mubr.bf16.gmra.mxu0 %v202
    %v238 = vpop.f32.mrf.mxu0
    %v239 = vadd.f32 %v178, %v238
    %v240 = vpop.f32.mrf.mxu0
    %v241 = vpop.f32.mrf.mxu0
    %v242 = vadd.f32 %v181, %v241
    %v243 = vpop.f32.mrf.mxu0
    %244 = vdwg.mxu0
    %v245 = vld [vmem:[#allocation7] sm:$0xf]
    %v246 = vld [vmem:[#allocation7 + $0x4] sm:$0xf]
    %v247 = vld [vmem:[#allocation11] sm:$0xf]
    %v248 = vld [vmem:[#allocation11 + $0x4] sm:$0xf]
    %v249 = vld [vmem:[#allocation11 + $0x8] sm:$0xf]
    %v250 = vld [vmem:[#allocation11 + $0xc] sm:$0xf]
    %v253 = vunpack.c.l.b16 %v245
    %v254 = vunpack.c.l.b16 %v246
    %v255 = vpack.c.b16 %v254, %v253
    %v260 = vunpack.c.l.b16 %v247
    %v261 = vunpack.c.l.b16 %v248
    %v262 = vunpack.c.l.b16 %v249
    %v263 = vunpack.c.l.b16 %v250
    %v264 = vpack.c.b16 %v261, %v260
    %v265 = vpack.c.b16 %v263, %v262
    %v269 = vsel %vm139, %v255, 0
    %271 = vmatprep.subr.bf16.mxu0 0
    %272 = vmatpush1.bf16.msra.mxu0 0
    %273 = vmatprep.subr.bf16.mxu0 0
    %274 = vmatpush1.bf16.msra.mxu0 0
    %275 = vmatprep.subr.bf16.mxu0 0
    %276 = vmatpush1.bf16.msra.mxu0 0
    %277 = vmatprep.subr.bf16.mxu0 0
    %278 = vmatpush1.bf16.msra.mxu0 0
    %279 = vmatprep.subr.bf16.mxu0 0
    %280 = vmatpush1.bf16.msra.mxu0 0
    %281 = vmatprep.subr.bf16.mxu0 0
    %282 = vmatpush1.bf16.msra.mxu0 0
    %283 = vmatprep.subr.bf16.mxu0 0
    %284 = vmatpush1.bf16.msra.mxu0 %v265
    %285 = vmatprep.subr.bf16.mxu0 0
    %286 = vmatpush1.bf16.msra.mxu0 %v264
    %287 = vmatprep.subr.bf16.mxu0 0
    %288 = vmatpush2.bf16.msra.mxu0 0
    %289 = vmatprep.subr.bf16.mxu0 0
    %290 = vmatpush2.bf16.msra.mxu0 0
    %291 = vmatprep.subr.bf16.mxu0 0
    %292 = vmatpush2.bf16.msra.mxu0 0
    %293 = vmatprep.subr.bf16.mxu0 0
    %294 = vmatpush2.bf16.msra.mxu0 0
    %295 = vmatprep.subr.bf16.mxu0 0
    %296 = vmatpush2.bf16.msra.mxu0 0
    %297 = vmatprep.subr.bf16.mxu0 0
    %298 = vmatpush2.bf16.msra.mxu0 0
    %299 = vmatprep.subr.bf16.mxu0 0
    %300 = vmatpush2.bf16.msra.mxu0 0
    %301 = vmatprep.subr.bf16.mxu0 0
    %302 = vmatpush2.bf16.msra.mxu0 0
    %303 = vmatprep.mubr.bf16.mxu0 0
    %304 = vmatmul.mubr.bf16.gmra.mxu0 %v269
    %v305 = vpop.f32.mrf.mxu0
    %v306 = vadd.f32 0.0, %v305
    %v307 = vpop.f32.mrf.mxu0
    %v308 = vpop.f32.mrf.mxu0
    %v309 = vadd.f32 0.0, %v308
    %v310 = vpop.f32.mrf.mxu0
    %311 = vdwg.mxu0
    %v312 = vadd.f32 %v239, %v306
    %v313 = vadd.f32 %v242, %v309
    %v314 = vld [vmem:[%s6] sm:$0x1]
    %v316 = vlaneseq
    %v317 = vshrl.u32 %v316, 7
    %v318 = vsub.s32 0, %v317
    %v319 = vrot.slane %v314, %v318
    %v321 = vadd.f32 %v312, %v319
    %v322 = vadd.f32 %v313, %v319
    %323 = vst [vmem:[#allocation13] sm:$0xff] %v321
    %324 = vst [vmem:[#allocation13 + $0x8] sm:$0xff] %v322
    // Predicated region
    $region54: #{tpu_custom_call.1} parent=1 // pred_check
      _
    $region55: #{tpu_custom_call.1} parent=1 // pred_check_branch
      %326 = sbr.rel (0) target = $region57
    $region56: #{tpu_custom_call.1} parent=1 // pred_region
      %s328 = ssub.s32 256, 256
      %329 = vsyncadd [#allocation4], %s328
      %s330 = sshll.u32 [#allocation13], 4
      %s331 = int_to_ptr.vmem [resolvable:$true] %s330
      %336 = dma.vmem_to_hbm [thread:$0]  %s331, 256, %s7, [#allocation4], 128, 128, 8
    $region57: #{tpu_custom_call.1} parent=1 // pred_fallthru
      _
    // Predicated region
    $region58: #{tpu_custom_call.1} parent=1 // pred_check
      _
    $region59: #{tpu_custom_call.1} parent=1 // pred_check_branch
      %338 = sbr.rel (0) target = $region61
    $region60: #{tpu_custom_call.1} parent=1 // pred_region
      %339 = dma.done [#allocation4], 256
    $region61: #{tpu_custom_call.1} parent=1 // pred_fallthru
      _
    %340 = vsyncpa [#allocation3], 1
    %341 = vsyncpa [#allocation6], 1
    %342 = vsyncpa [#allocation9], 1
    %343 = vsyncpa [#allocation12], 1
    %344 = vsyncpa [#allocation4], 1

</llo_original>
